<compile_context>
chip_gen: v6e
topology: v6e:2x2x1
jax: 0.10.0
libtpu: 0.0.40
codegen_flags: <defaults>
</compile_context>

<pallas_src>
import functools

import jax
import jax.numpy as jnp
from jax.experimental import pallas as pl
from jax.experimental.pallas import tpu as pltpu

KSIZES = (1, 2, 3, 4)     # conv1..conv4 kernel sizes
KWIN = 4                  # unified tap window (4x4) covering all kernels
NTAPS = KWIN * KWIN
# Unified 'same' padding over all taps: before = max((k-1)//2) = 1,
#                                       after  = max(k-1 - (k-1)//2) = 2.
PAD_LO, PAD_HI = 1, 2


# ---------------------------------------------------------------------------
# Pallas kernel: one fused MXU matmul + bias per 256-lane output tile.
# ---------------------------------------------------------------------------
def _convblock_kernel(patch_ref, wt_ref, b_ref, o_ref):
    """patch_ref: (1, K, HW)   lane-dense im2col tile for this batch element
       wt_ref   : (Cout, K)    fused, zero-padded conv weights
       b_ref    : (Cout, 1)    fused biases
       o_ref    : (1, Cout, HW) NCHW-flat output tile (lane-dense)."""
    acc = jnp.dot(wt_ref[...], patch_ref[0],
                  preferred_element_type=jnp.float32)      # (Cout, HW) on MXU
    o_ref[0] = (acc + b_ref[...]).astype(o_ref.dtype)       # one unmasked store


# ---------------------------------------------------------------------------
# Host-side (jit-fused) glue: weight fusion + im2col patch.
# ---------------------------------------------------------------------------
def _fuse_params(params):
    """Fold the 4 conv weights/biases into one (Cout, 16*Cin) matrix + bias.

    Column layout matches the patch: col = (dy*4 + dx) * Cin + c, where
    (dy, dx) is the tap position in the unified 4x4 window.
    """
    blocks = []
    for idx, k in enumerate(KSIZES):
        w = params[f"w{idx + 1}"].astype(jnp.float32)        # (d, Cin, k, k)
        off = PAD_LO - (k - 1) // 2                          # tap offset in window
        w4 = jnp.pad(w, ((0, 0), (0, 0),
                         (off, KWIN - k - off), (off, KWIN - k - off)))
        blocks.append(w4.transpose(0, 2, 3, 1).reshape(w.shape[0], -1))
    wt = jnp.concatenate(blocks, axis=0)                      # (Cout, 16*Cin)
    bf = jnp.concatenate(
        [params[f"b{i}"].astype(jnp.float32) for i in range(1, 5)]
    ).reshape(-1, 1)                                          # (Cout, 1)
    return wt, bf


def _im2col(x_nchw):
    """(B, Cin, H, W) -> (B, 16*Cin, H*W), tap-major rows, spatial on lanes."""
    B, Cin, H, W = x_nchw.shape
    xp = jnp.pad(x_nchw,
                 ((0, 0), (0, 0), (PAD_LO, PAD_HI), (PAD_LO, PAD_HI)))
    slabs = [xp[:, :, dy:dy + H, dx:dx + W]                   # (B, Cin, H, W)
             for dy in range(KWIN) for dx in range(KWIN)]
    patch = jnp.stack(slabs, axis=1)                          # (B, 16, Cin, H, W)
    return patch.reshape(B, NTAPS * Cin, H * W)


@jax.jit
def conv_block_forward(x_nchw, params):
    """ConvBlock forward.  x_nchw: (B, Cin, H, W) -> (B, 4*d, H, W)."""
    B, Cin, H, W = x_nchw.shape
    d = params["w1"].shape[0]
    Cout = 4 * d
    K = NTAPS * Cin
    HW = H * W

    wt, bf = _fuse_params(params)       # tiny; fused into this jit program
    patch = _im2col(x_nchw)             # (B, K, HW), ~128 KB at these shapes

    out_flat = pl.pallas_call(
        _convblock_kernel,
        out_shape=jax.ShapeDtypeStruct((B, Cout, HW), x_nchw.dtype),
        grid=(B,),
        in_specs=[
            pl.BlockSpec((1, K, HW), lambda b: (b, 0, 0)),
            pl.BlockSpec((Cout, K), lambda b: (0, 0)),
            pl.BlockSpec((Cout, 1), lambda b: (0, 0)),
        ],
        out_specs=pl.BlockSpec((1, Cout, HW), lambda b: (b, 0, 0)),
        compiler_params=pltpu.CompilerParams(
            dimension_semantics=("parallel",),
            vmem_limit_bytes=32 * 1024 * 1024),
    )(patch, wt, bf)

    # Minor-dim split (H*W -> H, W) outside the kernel; tiny and jit-fused.
    return out_flat.reshape(B, Cout, H, W)


if __name__ == "__main__":
    B, Cin, H, W = 2, 4, 16, 16
    output_dim = 32
    d = output_dim // 4

    key = jax.random.PRNGKey(0)
    keys = jax.random.split(key, 9)
    x = jax.random.normal(keys[0], (B, Cin, H, W), dtype=jnp.float32)

    # Deterministic param init (PyTorch-like uniform(-1/sqrt(fan_in), ...)).
    params = {}
    for i, k in enumerate(KSIZES):
        fan_in = Cin * k * k
        bound = 1.0 / (fan_in ** 0.5)
        params[f"w{i + 1}"] = jax.random.uniform(
            keys[1 + 2 * i], (d, Cin, k, k), minval=-bound, maxval=bound,
            dtype=jnp.float32)
        params[f"b{i + 1}"] = jax.random.uniform(
            keys[2 + 2 * i], (d,), minval=-bound, maxval=bound,
            dtype=jnp.float32)

    out = jax.block_until_ready(conv_block_forward(x, params))
    assert out.shape == (B, output_dim, H, W)

    # Reference: XLA conv with 'SAME' padding matches PyTorch padding='same'
    # (both put floor((k-1)/2) before, rest after — holds for k = 2, 4 too).
    refs = []
    for i, k in enumerate(KSIZES):
        r = jax.lax.conv_general_dilated(
            x, params[f"w{i + 1}"], window_strides=(1, 1), padding="SAME",
            dimension_numbers=("NCHW", "OIHW", "NCHW"))
        refs.append(r + params[f"b{i + 1}"].reshape(1, d, 1, 1))
    ref = jnp.concatenate(refs, axis=1)
    assert jnp.allclose(out, ref, atol=1e-4, rtol=1e-4), "mismatch vs reference"

    print("KERNEL_OK")
</pallas_src>

<mosaic_0001>
module attributes {stable_mosaic.version = 11 : i64} {
  func.func @_convblock_kernel(%arg0: i32, %arg1: memref<1x64x256xf32, #tpu.memory_space<vmem>>, %arg2: memref<32x64xf32, #tpu.memory_space<vmem>>, %arg3: memref<32x1xf32, #tpu.memory_space<vmem>>, %arg4: memref<1x32x256xf32, #tpu.memory_space<vmem>>) attributes {dimension_semantics = [#tpu.dimension_semantics<parallel>], iteration_bounds = array<i64: 2>, scalar_prefetch = 0 : i64, scratch_operands = 0 : i64, tpu.core_type = #tpu.core_type<tc>, window_params = [{transform_indices = @transform_0, window_bounds = array<i64: 1, 64, 256>}, {pipeline_mode = #tpu.pipeline_mode<synchronous>, transform_indices = @transform_1, window_bounds = array<i64: 32, 64>}, {pipeline_mode = #tpu.pipeline_mode<synchronous>, transform_indices = @transform_2, window_bounds = array<i64: 32, 1>}, {transform_indices = @transform_3, window_bounds = array<i64: 1, 32, 256>}]} {
    %c0 = arith.constant 0 : index
    %c0_0 = arith.constant 0 : index
    %0 = vector.load %arg2[%c0, %c0_0] : memref<32x64xf32, #tpu.memory_space<vmem>>, vector<32x64xf32>
    %c0_1 = arith.constant 0 : index
    %c0_2 = arith.constant 0 : index
    %c0_3 = arith.constant 0 : index
    %1 = vector.load %arg1[%c0_1, %c0_2, %c0_3] : memref<1x64x256xf32, #tpu.memory_space<vmem>>, vector<1x64x256xf32>
    %2 = vector.shape_cast %1 : vector<1x64x256xf32> to vector<64x256xf32>
    %cst = arith.constant dense<0.000000e+00> : vector<32x256xf32>
    %3 = tpu.matmul %0, %2, %cst {dimension_numbers = #tpu.dot_dimension_numbers<[1], [0], [0], [1], [0, 0, 1, 1], [], []>} : vector<32x64xf32>, vector<64x256xf32>, vector<32x256xf32> -> vector<32x256xf32>
    %c0_4 = arith.constant 0 : index
    %c0_5 = arith.constant 0 : index
    %4 = vector.load %arg3[%c0_4, %c0_5] : memref<32x1xf32, #tpu.memory_space<vmem>>, vector<32x1xf32>
    %5 = vector.broadcast %4 : vector<32x1xf32> to vector<32x256xf32>
    %6 = arith.addf %3, %5 : vector<32x256xf32>
    %c0_6 = arith.constant 0 : index
    %c0_7 = arith.constant 0 : index
    %c0_8 = arith.constant 0 : index
    %7 = vector.load %arg4[%c0_6, %c0_7, %c0_8] : memref<1x32x256xf32, #tpu.memory_space<vmem>>, vector<1x32x256xf32>
    %8 = vector.shape_cast %7 : vector<1x32x256xf32> to vector<32x256xf32>
    %9 = vector.shape_cast %6 : vector<32x256xf32> to vector<1x32x256xf32>
    tpu.vector_store %arg4[%c0_6, %c0_7, %c0_8], %9 {strides = array<i32>} : memref<1x32x256xf32, #tpu.memory_space<vmem>>, vector<1x32x256xf32>,
    return
  }
  func.func @transform_0(%arg0: i32) -> (i32, i32, i32) {
    %c0_i32 = arith.constant 0 : i32
    %c0_i32_0 = arith.constant 0 : i32
    %c0_i32_1 = arith.constant 0 : i32
    return %arg0, %c0_i32, %c0_i32_0 : i32, i32, i32
  }
  func.func @transform_1(%arg0: i32) -> (i32, i32) {
    %c0_i32 = arith.constant 0 : i32
    %c0_i32_0 = arith.constant 0 : i32
    %c0_i32_1 = arith.constant 0 : i32
    return %c0_i32, %c0_i32_0 : i32, i32
  }
  func.func @transform_2(%arg0: i32) -> (i32, i32) {
    %c0_i32 = arith.constant 0 : i32
    %c0_i32_0 = arith.constant 0 : i32
    %c0_i32_1 = arith.constant 0 : i32
    return %c0_i32, %c0_i32_0 : i32, i32
  }
  func.func @transform_3(%arg0: i32) -> (i32, i32, i32) {
    %c0_i32 = arith.constant 0 : i32
    %c0_i32_0 = arith.constant 0 : i32
    %c0_i32_1 = arith.constant 0 : i32
    return %arg0, %c0_i32, %c0_i32_0 : i32, i32, i32
  }
}

</mosaic_0001>

<llo_original>
// kernel: conv_block_forward.1
$region0: #{conv_block_forward.1}
  #allocation0 [shape = 'u32[]', space=smem, size = 0x4, offset = 0x4, fixed_abs, tag = 'smem constant byte address 0x4 - core index']
  #allocation1 [shape = 'u32[144,128]{1,0:T(1,128)}', space=vmem, size = 0x12000, scoped, tag = 'internal scratch']
  %s0 = inlined_call_operand.vmem [shape: f32[2,64,256], index: 0, kind: input, shape index: {}]
  %s1 = inlined_call_operand.vmem [shape: f32[32,64], index: 1, kind: input, shape index: {}]
  %s2 = inlined_call_operand.vmem [shape: f32[32,1], index: 2, kind: input, shape index: {}]
  %s3 = inlined_call_operand.vmem [shape: f32[2,32,256], index: 3, kind: output, shape index: {}]
  %s4 = sld [smem:[#allocation0]]
  $region45: #{conv_block_forward.1} parent=0
    _
  %s6 = ssub.s32 1, %s4
  %s7 = scalar_select 0, %s6, %s4
  loop: start=0, step=1, limit=4
  $region2: #{conv_block_forward.1} parent=0 // loop_pre_header
    _
  $region3: #{conv_block_forward.1} parent=0 // loop_header
    %s9 = sphi 0, %s13
    %p10 = scmp.ge.s32.totalorder %s9, 4
    %s19 = sphi 0, %s21
    %s22 = sphi 0, %s19
    %s23 = sphi 0, %s22
    %s39 = sphi 0, %s23
    %s43 = sphi 0, %s43
    %s45 = sphi 0, %s43
    %s46 = sphi 0, %s45
    %s60 = sphi 0, %s46
    %s64 = sphi 0, %s64
    %s66 = sphi 0, %s64
    %s67 = sphi 0, %s66
    %s81 = sphi 0, %s67
    %s87 = sphi 0, %s89
    %s90 = sphi 0, %s87
    %s91 = sphi 0, %s90
    %s107 = sphi 0, %s91
  $region4: #{conv_block_forward.1} parent=0 // loop_header_branch
    %12 = sbr.rel (%p10) target = $region8
  $region5: #{conv_block_forward.1} parent=0 // loop_body
    %s14 = ssub.s32 %s9, 1
    %s15 = ssub.s32 %s9, 2
    %s16 = sadd.s32 %s9, 1
    %s17 = ssub.s32 %s9, %s16
    %p18 = scmp.eq.s32.totalorder %s17, 0
    %s20 = sadd.s32 %s19, 1
    %s21 = scalar_select %p18, %s19, %s20
    %p24 = pneg %p18
    %p25 = scmp.eq.s32.totalorder %s9, 1
    %p26 = por %p24, %p25
    %p27 = scmp.ne.s32.totalorder %s19, %s22
    %p28 = scmp.eq.s32.totalorder %s9, 0
    %p29 = por %p27, %p28
    %p30 = scmp.ne.s32.totalorder %s19, %s22
    %p31 = scmp.eq.s32.totalorder %s14, 1
    %p32 = por %p30, %p31
    %p33 = scmp.ne.s32.totalorder %s22, %s23
    %p34 = scmp.eq.s32.totalorder %s14, 0
    %p35 = por %p33, %p34
    %p36 = scmp.ne.s32.totalorder %s22, %s23
    %p37 = scmp.eq.s32.totalorder %s15, 1
    %p38 = por %p36, %p37
    %p40 = scmp.ne.s32.totalorder %s23, %s39
    %p41 = scmp.eq.s32.totalorder %s15, 0
    %p42 = por %p40, %p41
    %s44 = sadd.s32 %s43, 1
    %p47 = scmp.eq.s32.totalorder %s9, 1
    %p48 = scmp.ne.s32.totalorder %s43, %s45
    %p49 = scmp.eq.s32.totalorder %s9, 0
    %p50 = por %p48, %p49
    %p51 = scmp.ne.s32.totalorder %s43, %s45
    %p52 = scmp.eq.s32.totalorder %s14, 1
    %p53 = por %p51, %p52
    %p54 = scmp.ne.s32.totalorder %s45, %s46
    %p55 = scmp.eq.s32.totalorder %s14, 0
    %p56 = por %p54, %p55
    %p57 = scmp.ne.s32.totalorder %s45, %s46
    %p58 = scmp.eq.s32.totalorder %s15, 1
    %p59 = por %p57, %p58
    %p61 = scmp.ne.s32.totalorder %s46, %s60
    %p62 = scmp.eq.s32.totalorder %s15, 0
    %p63 = por %p61, %p62
    %s65 = sadd.s32 %s64, 1
    %p68 = scmp.eq.s32.totalorder %s9, 1
    %p69 = scmp.ne.s32.totalorder %s64, %s66
    %p70 = scmp.eq.s32.totalorder %s9, 0
    %p71 = por %p69, %p70
    %p72 = scmp.ne.s32.totalorder %s64, %s66
    %p73 = scmp.eq.s32.totalorder %s14, 1
    %p74 = por %p72, %p73
    %p75 = scmp.ne.s32.totalorder %s66, %s67
    %p76 = scmp.eq.s32.totalorder %s14, 0
    %p77 = por %p75, %p76
    %p78 = scmp.ne.s32.totalorder %s66, %s67
    %p79 = scmp.eq.s32.totalorder %s15, 1
    %p80 = por %p78, %p79
    %p82 = scmp.ne.s32.totalorder %s67, %s81
    %p83 = scmp.eq.s32.totalorder %s15, 0
    %p84 = por %p82, %p83
    %s85 = ssub.s32 %s9, %s16
    %p86 = scmp.eq.s32.totalorder %s85, 0
    %s88 = sadd.s32 %s87, 1
    %s89 = scalar_select %p86, %s87, %s88
    %p92 = pneg %p86
    %p93 = scmp.eq.s32.totalorder %s9, 1
    %p94 = por %p92, %p93
    %p95 = scmp.ne.s32.totalorder %s87, %s90
    %p96 = scmp.eq.s32.totalorder %s9, 0
    %p97 = por %p95, %p96
    %p98 = scmp.ne.s32.totalorder %s87, %s90
    %p99 = scmp.eq.s32.totalorder %s14, 1
    %p100 = por %p98, %p99
    %p101 = scmp.ne.s32.totalorder %s90, %s91
    %p102 = scmp.eq.s32.totalorder %s14, 0
    %p103 = por %p101, %p102
    %p104 = scmp.ne.s32.totalorder %s90, %s91
    %p105 = scmp.eq.s32.totalorder %s15, 1
    %p106 = por %p104, %p105
    %p108 = scmp.ne.s32.totalorder %s91, %s107
    %p109 = scmp.eq.s32.totalorder %s15, 0
    %p110 = por %p108, %p109
    %p111 = scmp.le.s32.totalorder 1, %s9
    %p112 = scmp.lt.s32.totalorder %s9, 3
    %p113 = pnand %p111, %p112
    %p114 = pneg %p113
    // Predicated region
    $region9: #{conv_block_forward.1} parent=5 // pred_check
      _
    $region10: #{conv_block_forward.1} parent=5 // pred_check_branch
      %116 = sbr.rel (%p113) target = $region12
    $region11: #{conv_block_forward.1} parent=5 // pred_region
      %s117 = ssub.s32 %s9, 1
      // Predicated region
      $region13: #{conv_block_forward.1} parent=11 // pred_check
        %p118 = pneg %p56
      $region14: #{conv_block_forward.1} parent=11 // pred_check_branch
        %120 = sbr.rel (%p118) target = $region16
      $region15: #{conv_block_forward.1} parent=11 // pred_region
        _
      $region16: #{conv_block_forward.1} parent=11 // pred_fallthru
        _
      // Predicated region
      $region17: #{conv_block_forward.1} parent=11 // pred_check
        %p121 = pneg %p77
      $region18: #{conv_block_forward.1} parent=11 // pred_check_branch
        %123 = sbr.rel (%p121) target = $region20
      $region19: #{conv_block_forward.1} parent=11 // pred_region
        _
      $region20: #{conv_block_forward.1} parent=11 // pred_fallthru
        _
    $region12: #{conv_block_forward.1} parent=5 // pred_fallthru
      _
    %p124 = scmp.lt.s32.totalorder %s9, 2
    // Predicated region
    $region21: #{conv_block_forward.1} parent=5 // pred_check
      %p125 = pneg %p124
    $region22: #{conv_block_forward.1} parent=5 // pred_check_branch
      %127 = sbr.rel (%p125) target = $region24
    $region23: #{conv_block_forward.1} parent=5 // pred_region
      // Predicated region
      $region25: #{conv_block_forward.1} parent=23 // pred_check
        %p128 = pneg %p29
      $region26: #{conv_block_forward.1} parent=23 // pred_check_branch
        %130 = sbr.rel (%p128) target = $region28
      $region27: #{conv_block_forward.1} parent=23 // pred_region
        %p131 = scmp.lt.s32.totalorder %s9, 1
        %s132 = scalar_select %p131, %s9, 1
        %s133 = smul.addr %s132, 16
        %s134 = smul.addr %s133, 8
        %s135 = scalar_lea.vmem %s0, %s134
      $region28: #{conv_block_forward.1} parent=23 // pred_fallthru
        _
    $region24: #{conv_block_forward.1} parent=5 // pred_fallthru
      _
    %p136 = scmp.le.s32.totalorder 1, %s9
    %p137 = scmp.lt.s32.totalorder %s9, 3
    %p138 = pnand %p136, %p137
    %p139 = pneg %p138
    // Predicated region
    $region29: #{conv_block_forward.1} parent=5 // pred_check
      _
    $region30: #{conv_block_forward.1} parent=5 // pred_check_branch
      %141 = sbr.rel (%p138) target = $region32
    $region31: #{conv_block_forward.1} parent=5 // pred_region
      %s142 = ssub.s32 %s9, 1
      %p143 = scmp.lt.s32.totalorder %s14, 1
      %s144 = scalar_select %p143, %s14, 1
      %s145 = smul.addr %s144, 16
      %s146 = smul.addr %s145, 8
      %s147 = scalar_lea.vmem %s0, %s146
      %p148 = pneg %p35
      %p149 = pneg %p32
      %p150 = pneg %p56
      %p151 = pneg %p53
      %p152 = pneg %p77
      %p153 = pneg %p74
      %p154 = pneg %p103
      %p155 = pneg %p100
      %p156 = scmp.lt.s32.totalorder %s14, 1
      %s157 = scalar_select %p156, %s14, 1
      %s158 = smul.addr %s157, 8
      %s159 = smul.addr %s158, 8
      %s160 = scalar_lea.vmem %s3, %s159
      %p161 = scmp.lt.s32.totalorder %s14, 1
      %s162 = scalar_select %p161, %s14, 1
      %s163 = smul.addr %s162, 16
      %s164 = smul.addr %s163, 8
      %s165 = scalar_lea.vmem %s0, %s164
      %p166 = scmp.lt.s32.totalorder %s14, 1
      %s167 = scalar_select %p166, %s14, 1
      %s168 = smul.addr %s167, 8
      %s169 = smul.addr %s168, 8
      %s170 = scalar_lea.vmem %s3, %s169
      %v171 = vld [vmem:[%s1] sm:$0xff]
      %v172 = vld [vmem:[%s1 + $0x8] sm:$0xff]
      %v173 = vld [vmem:[%s1 + $0x10] sm:$0xff]
      %v174 = vld [vmem:[%s1 + $0x18] sm:$0xff]
      %v175 = vld [vmem:[%s165] sm:$0xff]
      %v176 = vld [vmem:[%s165 + $0x8] sm:$0xff]
      %v177 = vld [vmem:[%s165 + $0x10] sm:$0xff]
      %v178 = vld [vmem:[%s165 + $0x18] sm:$0xff]
      %v179 = vld [vmem:[%s165 + $0x20] sm:$0xff]
      %v180 = vld [vmem:[%s165 + $0x28] sm:$0xff]
      %v181 = vld [vmem:[%s165 + $0x30] sm:$0xff]
      %v182 = vld [vmem:[%s165 + $0x38] sm:$0xff]
      %v183 = vld [vmem:[%s165 + $0x40] sm:$0xff]
      %v184 = vld [vmem:[%s165 + $0x48] sm:$0xff]
      %v185 = vld [vmem:[%s165 + $0x50] sm:$0xff]
      %v186 = vld [vmem:[%s165 + $0x58] sm:$0xff]
      %v187 = vld [vmem:[%s165 + $0x60] sm:$0xff]
      %v188 = vld [vmem:[%s165 + $0x68] sm:$0xff]
      %v189 = vld [vmem:[%s165 + $0x70] sm:$0xff]
      %v190 = vld [vmem:[%s165 + $0x78] sm:$0xff]
      %v191 = vld [vmem:[%s2] sm:$0xff]
      %v192 = vld [vmem:[%s2 + $0x8] sm:$0xff]
      %v193 = vld [vmem:[%s2 + $0x10] sm:$0xff]
      %v194 = vld [vmem:[%s2 + $0x18] sm:$0xff]
      %196 = vset.pattern.permute.xlu0 0
      %197 = vperm.xlu0 %196, %v191
      %v198 = vpop.permute.xlu0 %197
      %201 = vset.pattern.permute.xlu0 0
      %202 = vperm.xlu0 %201, %v192
      %v203 = vpop.permute.xlu0 %202
      %206 = vset.pattern.permute.xlu0 0
      %207 = vperm.xlu0 %206, %v193
      %v208 = vpop.permute.xlu0 %207
      %211 = vset.pattern.permute.xlu0 0
      %212 = vperm.xlu0 %211, %v194
      %v213 = vpop.permute.xlu0 %212
      %vm215 = vcmask 523264
      %v217 = vsel %vm215, %v171, 0
      %v220 = vsel %vm215, %v172, 0
      %v223 = vsel %vm215, %v173, 0
      %v226 = vsel %vm215, %v174, 0
      %228 = vmatprep.subr.mxu0 0.0
      %229 = vmatpush1.msra.mxu0 0.0
      %230 = vmatprep.subr.mxu0 0.0
      %231 = vmatpush1.msra.mxu0 0.0
      %232 = vmatprep.subr.mxu0 0.0
      %233 = vmatpush1.msra.mxu0 0.0
      %234 = vmatprep.subr.mxu0 0.0
      %235 = vmatpush1.msra.mxu0 0.0
      %236 = vmatprep.subr.mxu0 0.0
      %237 = vmatpush1.msra.mxu0 0.0
      %238 = vmatprep.subr.mxu0 0.0
      %239 = vmatpush1.msra.mxu0 0.0
      %240 = vmatprep.subr.mxu0 0.0
      %241 = vmatpush1.msra.mxu0 0.0
      %242 = vmatprep.subr.mxu0 0.0
      %243 = vmatpush1.msra.mxu0 0.0
      %244 = vmatprep.subr.mxu0 %v190
      %245 = vmatpush1.msra.mxu0 %v189
      %246 = vmatprep.subr.mxu0 %v188
      %247 = vmatpush1.msra.mxu0 %v187
      %248 = vmatprep.subr.mxu0 %v186
      %249 = vmatpush1.msra.mxu0 %v185
      %250 = vmatprep.subr.mxu0 %v184
      %251 = vmatpush1.msra.mxu0 %v183
      %252 = vmatprep.subr.mxu0 %v182
      %253 = vmatpush1.msra.mxu0 %v181
      %254 = vmatprep.subr.mxu0 %v180
      %255 = vmatpush1.msra.mxu0 %v179
      %256 = vmatprep.subr.mxu0 %v178
      %257 = vmatpush1.msra.mxu0 %v177
      %258 = vmatprep.subr.mxu0 %v176
      %259 = vmatpush1.msra.mxu0 %v175
      %260 = vmatprep.subr.mxu0 0.0
      %261 = vmatpush2.msra.mxu0 0.0
      %262 = vmatprep.subr.mxu0 0.0
      %263 = vmatpush2.msra.mxu0 0.0
      %264 = vmatprep.subr.mxu0 0.0
      %265 = vmatpush2.msra.mxu0 0.0
      %266 = vmatprep.subr.mxu0 0.0
      %267 = vmatpush2.msra.mxu0 0.0
      %268 = vmatprep.subr.mxu0 0.0
      %269 = vmatpush2.msra.mxu0 0.0
      %270 = vmatprep.subr.mxu0 0.0
      %271 = vmatpush2.msra.mxu0 0.0
      %272 = vmatprep.subr.mxu0 0.0
      %273 = vmatpush2.msra.mxu0 0.0
      %274 = vmatprep.subr.mxu0 0.0
      %275 = vmatpush2.msra.mxu0 0.0
      %276 = vmatprep.subr.mxu0 0.0
      %277 = vmatpush2.msra.mxu0 0.0
      %278 = vmatprep.subr.mxu0 0.0
      %279 = vmatpush2.msra.mxu0 0.0
      %280 = vmatprep.subr.mxu0 0.0
      %281 = vmatpush2.msra.mxu0 0.0
      %282 = vmatprep.subr.mxu0 0.0
      %283 = vmatpush2.msra.mxu0 0.0
      %284 = vmatprep.subr.mxu0 0.0
      %285 = vmatpush2.msra.mxu0 0.0
      %286 = vmatprep.subr.mxu0 0.0
      %287 = vmatpush2.msra.mxu0 0.0
      %288 = vmatprep.subr.mxu0 0.0
      %289 = vmatpush2.msra.mxu0 0.0
      %290 = vmatprep.subr.mxu0 0.0
      %291 = vmatpush2.msra.mxu0 0.0
      %292 = vmatprep.mubr.f32.mxu0 0.0
      %293 = vmatmul.mubr.f32.gmra.mxu0 %v217
      %v294 = vpop.f32.mrf.mxu0
      %v295 = vadd.f32 %v198, %v294
      %v296 = vpop.f32.mrf.mxu0
      %v297 = vadd.f32 %v198, %v296
      %298 = vmatprep.mubr.f32.mxu0 0.0
      %299 = vmatmul.mubr.f32.gmra.mxu0 %v220
      %v300 = vpop.f32.mrf.mxu0
      %v301 = vadd.f32 %v203, %v300
      %v302 = vpop.f32.mrf.mxu0
      %v303 = vadd.f32 %v203, %v302
      %304 = vmatprep.mubr.f32.mxu0 0.0
      %305 = vmatmul.mubr.f32.gmra.mxu0 %v223
      %v306 = vpop.f32.mrf.mxu0
      %v307 = vadd.f32 %v208, %v306
      %v308 = vpop.f32.mrf.mxu0
      %v309 = vadd.f32 %v208, %v308
      %310 = vmatprep.mubr.f32.mxu0 0.0
      %311 = vmatmul.mubr.f32.gmra.mxu0 %v226
      %v312 = vpop.f32.mrf.mxu0
      %v313 = vadd.f32 %v213, %v312
      %v314 = vpop.f32.mrf.mxu0
      %v315 = vadd.f32 %v213, %v314
      %316 = vdwg.mxu0
      %317 = vst [vmem:[%s170] sm:$0xff] %v295
      %318 = vst [vmem:[%s170 + $0x8] sm:$0xff] %v297
      %319 = vst [vmem:[%s170 + $0x10] sm:$0xff] %v301
      %320 = vst [vmem:[%s170 + $0x18] sm:$0xff] %v303
      %321 = vst [vmem:[%s170 + $0x20] sm:$0xff] %v307
      %322 = vst [vmem:[%s170 + $0x28] sm:$0xff] %v309
      %323 = vst [vmem:[%s170 + $0x30] sm:$0xff] %v313
      %324 = vst [vmem:[%s170 + $0x38] sm:$0xff] %v315
      %p325 = scmp.lt.s32.totalorder %s14, 1
      %s326 = scalar_select %p325, %s14, 1
      %s327 = smul.addr %s326, 8
      %s328 = smul.addr %s327, 8
      %s329 = scalar_lea.vmem %s3, %s328
      // Predicated region
      $region33: #{conv_block_forward.1} parent=31 // pred_check
        %p330 = pneg %p100
      $region34: #{conv_block_forward.1} parent=31 // pred_check_branch
        %332 = sbr.rel (%p330) target = $region36
      $region35: #{conv_block_forward.1} parent=31 // pred_region
        _
      $region36: #{conv_block_forward.1} parent=31 // pred_fallthru
        _
    $region32: #{conv_block_forward.1} parent=5 // pred_fallthru
      _
    %p333 = scmp.le.s32.totalorder 2, %s9
    // Predicated region
    $region37: #{conv_block_forward.1} parent=5 // pred_check
      %p334 = pneg %p333
    $region38: #{conv_block_forward.1} parent=5 // pred_check_branch
      %336 = sbr.rel (%p334) target = $region40
    $region39: #{conv_block_forward.1} parent=5 // pred_region
      %s337 = ssub.s32 %s9, 2
      // Predicated region
      $region41: #{conv_block_forward.1} parent=39 // pred_check
        %p338 = pneg %p106
      $region42: #{conv_block_forward.1} parent=39 // pred_check_branch
        %340 = sbr.rel (%p338) target = $region44
      $region43: #{conv_block_forward.1} parent=39 // pred_region
        %p341 = scmp.lt.s32.totalorder %s15, 1
        %s342 = scalar_select %p341, %s15, 1
        %s343 = smul.addr %s342, 8
        %s344 = smul.addr %s343, 8
        %s345 = scalar_lea.vmem %s3, %s344
      $region44: #{conv_block_forward.1} parent=39 // pred_fallthru
        _
    $region40: #{conv_block_forward.1} parent=5 // pred_fallthru
      _
  $region6: #{conv_block_forward.1} parent=0 // loop_footer
    %s13 = sadd.s32 1, %s9
  $region7: #{conv_block_forward.1} parent=0 // loop_footer_branch
    %8 = sbr.rel target = $region3
  $region8: #{conv_block_forward.1} parent=0 // loop_exit
    _

</llo_original>
